<compile_context>
chip_gen: v7x
topology: tpu7x:2x2x1
jax: 0.10.0
libtpu: 0.0.40
codegen_flags: <defaults>
</compile_context>

<pallas_src>
import jax
import jax.numpy as jnp
from jax.experimental import pallas as pl
from jax.experimental.pallas import tpu as pltpu

BN_EPS = 1e-5

# Conservative VMEM numbers that are safe on v5e / v6e / v7x alike.
_VMEM_LIMIT_BYTES = 32 * 1024 * 1024    # raise scoped limit (v5e default is 16 MiB)
_VMEM_BUDGET_BYTES = 20 * 1024 * 1024   # target per-step working set (headroom vs limit)


# --------------------------------------------------------------------------- #
# In-kernel building blocks
# --------------------------------------------------------------------------- #
def _bn_relu_train(y, gamma_row, beta_row, inv_b):
    """Training-mode BatchNorm1d + ReLU on a (B, N) tile.

    One-pass statistics; both column sums go through the MXU (idle after the
    layer matmul) instead of the VALU/XLU reduction path.
    """
    b = y.shape[0]
    ones = jnp.ones((1, b), jnp.float32)
    s1 = jnp.dot(ones, y, preferred_element_type=jnp.float32)        # sum    (1, N)
    s2 = jnp.dot(ones, y * y, preferred_element_type=jnp.float32)    # sum x^2 (1, N)
    mean = s1 * inv_b
    var = jnp.maximum(s2 * inv_b - mean * mean, 0.0)                 # one-pass, clamped
    scale = gamma_row * jax.lax.rsqrt(var + BN_EPS)                  # EUP rsqrt
    shift = beta_row - mean * scale
    return jnp.maximum(y * scale + shift, 0.0)


def _linear1(x, w1):
    """Linear(4 -> 32): K=4, so 4 broadcast FMAs on the VPU (no MXU round trip).

    Bias omitted: exactly cancelled by the BN batch-mean subtraction.  This
    block is hoisted so it runs exactly once per forward pass.
    """
    h = x[:, 0:1] * w1[0:1, :]
    for k in range(1, 4):
        h = h + x[:, k:k + 1] * w1[k:k + 1, :]
    return h


# --------------------------------------------------------------------------- #
# Kernels
# --------------------------------------------------------------------------- #
def _fused_kernel(x_ref, w1_ref, gb1_ref, w2_ref, gb2_ref, o_ref):
    """Whole forward in one grid step (no per-step pipeline overhead)."""
    inv_b = 1.0 / x_ref.shape[0]
    h = _linear1(x_ref[...], w1_ref[...])                                   # (B, 32)
    h = _bn_relu_train(h, gb1_ref[0:1, :], gb1_ref[1:2, :], inv_b)
    y = jnp.dot(h, w2_ref[...], preferred_element_type=jnp.float32)         # MXU, K=32
    o_ref[...] = _bn_relu_train(y, gb2_ref[0:1, :], gb2_ref[1:2, :], inv_b)


def _layer1_kernel(x_ref, w1_ref, gb1_ref, h_ref):
    """Layer 1 (Linear(4->32) + BN1 + ReLU), computed once for the split path."""
    inv_b = 1.0 / x_ref.shape[0]
    h = _linear1(x_ref[...], w1_ref[...])
    h_ref[...] = _bn_relu_train(h, gb1_ref[0:1, :], gb1_ref[1:2, :], inv_b)


def _layer2_kernel(h_ref, w2_ref, gb2_ref, o_ref):
    """Layer 2 (Linear(32->tile_n) + BN2 + ReLU) on one feature tile."""
    inv_b = 1.0 / h_ref.shape[0]
    y = jnp.dot(h_ref[...], w2_ref[...], preferred_element_type=jnp.float32)
    o_ref[...] = _bn_relu_train(y, gb2_ref[0:1, :], gb2_ref[1:2, :], inv_b)


# --------------------------------------------------------------------------- #
# Wrapper: tile selection + pallas_call plumbing
# --------------------------------------------------------------------------- #
def _layer2_step_bytes(b, t):
    # double-buffered out + live f32 y + double-buffered w2 tile
    # + double-buffered gb2 tile (sublane-padded to 8) + lane-padded h block.
    return 4 * (3 * b * t + 2 * 32 * t + 2 * 8 * t + 128 * b)


def _choose_tile_n(b, f, budget_bytes):
    t = f
    # Largest tile that keeps the per-step working set under the VMEM budget
    # (while staying a multiple of 128 that divides F).
    while _layer2_step_bytes(b, t) > budget_bytes and t % 256 == 0:
        t //= 2
    # If the problem is large enough to be compute-bound, keep >= 2 grid steps
    # so dimension_semantics=("parallel",) can shard across v7x's 2 TensorCores.
    # (Useless for tiny B*F: per-step overhead would eat the gain.)
    if t == f and f % 256 == 0 and b * f >= (1 << 21):
        t = f // 2
    return t


def pose_encoder_forward(x, params, *, tile_n=None):
    """x: (B, 4) float32 -> (B, feature_size) float32 (training-mode BN)."""
    (w1, b1, g1, be1, w2, b2, g2, be2) = params
    del b1, b2  # exactly cancelled by training-mode BatchNorm; never sent to TPU
    B = x.shape[0]
    F = w2.shape[1]
    assert F % 128 == 0, "feature_size must be a multiple of 128 (lane-dense stores)"
    # NOTE: B should ideally be a multiple of 8 (f32 sublane) for unmasked
    # stores; any B is still numerically correct.  The full batch lives in
    # every tile (BN needs batch statistics), so very large B would need a
    # two-pass cross-tile BN reduction design.
    # TODO(synk): eval-mode BN (running stats) and running-stat updates are not
    # implemented; this kernel is the training-mode forward only.

    # Pack per-feature BN params: row 0 = gamma, row 1 = beta (fewer DMAs).
    gb1 = jnp.concatenate([g1, be1], axis=0)   # (2, 32)
    gb2 = jnp.concatenate([g2, be2], axis=0)   # (2, F)

    if tile_n is None:
        tile_n = _choose_tile_n(B, F, _VMEM_BUDGET_BYTES)
    assert F % tile_n == 0 and tile_n % 128 == 0
    n_steps = F // tile_n

    cparams = pltpu.CompilerParams(vmem_limit_bytes=_VMEM_LIMIT_BYTES)

    if n_steps == 1:
        # Whole problem in one grid step: fused kernel, full-array blocks.
        return pl.pallas_call(
            _fused_kernel,
            out_shape=jax.ShapeDtypeStruct((B, F), jnp.float32),
            compiler_params=cparams,
        )(x, w1, gb1, w2, gb2)

    # Split path: layer 1 computed once, then layer 2 tiled over the F axis.
    h = pl.pallas_call(
        _layer1_kernel,
        out_shape=jax.ShapeDtypeStruct((B, 32), jnp.float32),
        compiler_params=cparams,
    )(x, w1, gb1)

    return pl.pallas_call(
        _layer2_kernel,
        out_shape=jax.ShapeDtypeStruct((B, F), jnp.float32),
        grid=(n_steps,),
        in_specs=[
            pl.BlockSpec((B, 32), lambda j: (0, 0)),        # h  (grid-invariant)
            pl.BlockSpec((32, tile_n), lambda j: (0, j)),   # w2 feature tile
            pl.BlockSpec((2, tile_n), lambda j: (0, j)),    # [gamma2; beta2] tile
        ],
        out_specs=pl.BlockSpec((B, tile_n), lambda j: (0, j)),
        compiler_params=pltpu.CompilerParams(
            dimension_semantics=("parallel",),
            vmem_limit_bytes=_VMEM_LIMIT_BYTES),
    )(h, w2, gb2)


# --------------------------------------------------------------------------- #
# Params + pure-JAX reference (faithful torch semantics, biases included)
# --------------------------------------------------------------------------- #
def init_params(key, feature_size=128):
    """Deterministic init mimicking torch defaults (U(-1/sqrt(fan_in), +))."""
    k1, k2, k3, k4 = jax.random.split(key, 4)
    bound1 = 1.0 / jnp.sqrt(4.0)
    bound2 = 1.0 / jnp.sqrt(32.0)
    w1 = jax.random.uniform(k1, (4, 32), jnp.float32, -bound1, bound1)
    b1 = jax.random.uniform(k2, (1, 32), jnp.float32, -bound1, bound1)
    g1 = jnp.ones((1, 32), jnp.float32)
    be1 = jnp.zeros((1, 32), jnp.float32)
    w2 = jax.random.uniform(k3, (32, feature_size), jnp.float32, -bound2, bound2)
    b2 = jax.random.uniform(k4, (1, feature_size), jnp.float32, -bound2, bound2)
    g2 = jnp.ones((1, feature_size), jnp.float32)
    be2 = jnp.zeros((1, feature_size), jnp.float32)
    return (w1, b1, g1, be1, w2, b2, g2, be2)


def _batchnorm_train_ref(h, gamma, beta):
    mean = jnp.mean(h, axis=0, keepdims=True)
    var = jnp.mean((h - mean) ** 2, axis=0, keepdims=True)
    return (h - mean) * jax.lax.rsqrt(var + BN_EPS) * gamma + beta


def reference_forward(x, params):
    # Faithful torch semantics (biases included) -- verifies the in-kernel
    # bias cancellation and the one-pass BN statistics are exact enough.
    (w1, b1, g1, be1, w2, b2, g2, be2) = params
    h = x @ w1 + b1
    h = jnp.maximum(_batchnorm_train_ref(h, g1, be1), 0.0)
    y = h @ w2 + b2
    return jnp.maximum(_batchnorm_train_ref(y, g2, be2), 0.0)


if __name__ == "__main__":
    key = jax.random.PRNGKey(0)
    k_in, k_p, k_in2, k_p2 = jax.random.split(key, 4)

    # ---- Path 1: fused single-step kernel (typical small pose-encoder size).
    B, FEATURE_SIZE = 8, 128
    # encoded_poses: (batch, 4) = [z_norm, pitch_norm, sin(roll), cos(roll)]
    x = jax.random.normal(k_in, (B, 4), jnp.float32)
    params = init_params(k_p, feature_size=FEATURE_SIZE)

    out = jax.block_until_ready(pose_encoder_forward(x, params))
    ref = reference_forward(x, params)
    assert out.shape == (B, FEATURE_SIZE)
    assert jnp.allclose(out, ref, atol=2e-3, rtol=2e-3), "fused path mismatch"

    # ---- Path 2: split (layer-1 once + F-tiled layer-2) kernel, forced tiles.
    B2, F2 = 8, 256
    x2 = jax.random.normal(k_in2, (B2, 4), jnp.float32)
    params2 = init_params(k_p2, feature_size=F2)

    out2 = jax.block_until_ready(pose_encoder_forward(x2, params2, tile_n=128))
    ref2 = reference_forward(x2, params2)
    assert out2.shape == (B2, F2)
    assert jnp.allclose(out2, ref2, atol=2e-3, rtol=2e-3), "split path mismatch"

    print("KERNEL_OK")
</pallas_src>

<mosaic_0001>
module attributes {stable_mosaic.version = 11 : i64} {
  func.func @_fused_kernel(%arg0: memref<8x4xf32, #tpu.memory_space<vmem>>, %arg1: memref<4x32xf32, #tpu.memory_space<vmem>>, %arg2: memref<2x32xf32, #tpu.memory_space<vmem>>, %arg3: memref<32x128xf32, #tpu.memory_space<vmem>>, %arg4: memref<2x128xf32, #tpu.memory_space<vmem>>, %arg5: memref<8x128xf32, #tpu.memory_space<vmem>>) attributes {dimension_semantics = [], scalar_prefetch = 0 : i64, scratch_operands = 0 : i64, tpu.core_type = #tpu.core_type<tc>} {
    %c0 = arith.constant 0 : index
    %c0_0 = arith.constant 0 : index
    %0 = vector.load %arg0[%c0, %c0_0] : memref<8x4xf32, #tpu.memory_space<vmem>>, vector<8x4xf32>
    %c0_1 = arith.constant 0 : index
    %c0_2 = arith.constant 0 : index
    %1 = vector.load %arg1[%c0_1, %c0_2] : memref<4x32xf32, #tpu.memory_space<vmem>>, vector<4x32xf32>
    %2 = vector.extract_strided_slice %0 {offsets = [0, 0], sizes = [8, 1], strides = [1, 1]} : vector<8x4xf32> to vector<8x1xf32>
    %3 = vector.extract_strided_slice %1 {offsets = [0, 0], sizes = [1, 32], strides = [1, 1]} : vector<4x32xf32> to vector<1x32xf32>
    %4 = vector.broadcast %2 : vector<8x1xf32> to vector<8x32xf32>
    %5 = vector.broadcast %3 : vector<1x32xf32> to vector<8x32xf32>
    %6 = arith.mulf %4, %5 : vector<8x32xf32>
    %7 = vector.extract_strided_slice %0 {offsets = [0, 1], sizes = [8, 1], strides = [1, 1]} : vector<8x4xf32> to vector<8x1xf32>
    %8 = vector.extract_strided_slice %1 {offsets = [1, 0], sizes = [1, 32], strides = [1, 1]} : vector<4x32xf32> to vector<1x32xf32>
    %9 = vector.broadcast %7 : vector<8x1xf32> to vector<8x32xf32>
    %10 = vector.broadcast %8 : vector<1x32xf32> to vector<8x32xf32>
    %11 = arith.mulf %9, %10 : vector<8x32xf32>
    %12 = arith.addf %6, %11 : vector<8x32xf32>
    %13 = vector.extract_strided_slice %0 {offsets = [0, 2], sizes = [8, 1], strides = [1, 1]} : vector<8x4xf32> to vector<8x1xf32>
    %14 = vector.extract_strided_slice %1 {offsets = [2, 0], sizes = [1, 32], strides = [1, 1]} : vector<4x32xf32> to vector<1x32xf32>
    %15 = vector.broadcast %13 : vector<8x1xf32> to vector<8x32xf32>
    %16 = vector.broadcast %14 : vector<1x32xf32> to vector<8x32xf32>
    %17 = arith.mulf %15, %16 : vector<8x32xf32>
    %18 = arith.addf %12, %17 : vector<8x32xf32>
    %19 = vector.extract_strided_slice %0 {offsets = [0, 3], sizes = [8, 1], strides = [1, 1]} : vector<8x4xf32> to vector<8x1xf32>
    %20 = vector.extract_strided_slice %1 {offsets = [3, 0], sizes = [1, 32], strides = [1, 1]} : vector<4x32xf32> to vector<1x32xf32>
    %21 = vector.broadcast %19 : vector<8x1xf32> to vector<8x32xf32>
    %22 = vector.broadcast %20 : vector<1x32xf32> to vector<8x32xf32>
    %23 = arith.mulf %21, %22 : vector<8x32xf32>
    %24 = arith.addf %18, %23 : vector<8x32xf32>
    %c0_3 = arith.constant 0 : index
    %c0_4 = arith.constant 0 : index
    %25 = vector.load %arg2[%c0_3, %c0_4] : memref<2x32xf32, #tpu.memory_space<vmem>>, vector<1x32xf32>
    %c1 = arith.constant 1 : index
    %c0_5 = arith.constant 0 : index
    %26 = vector.load %arg2[%c1, %c0_5] : memref<2x32xf32, #tpu.memory_space<vmem>>, vector<1x32xf32>
    %cst = arith.constant 1.000000e+00 : f32
    %27 = vector.broadcast %cst : f32 to vector<1x8xf32>
    %cst_6 = arith.constant dense<0.000000e+00> : vector<1x32xf32>
    %28 = tpu.matmul %27, %24, %cst_6 {dimension_numbers = #tpu.dot_dimension_numbers<[1], [0], [0], [1], [0, 0, 1, 1], [], []>} : vector<1x8xf32>, vector<8x32xf32>, vector<1x32xf32> -> vector<1x32xf32>
    %29 = arith.mulf %24, %24 : vector<8x32xf32>
    %cst_7 = arith.constant dense<0.000000e+00> : vector<1x32xf32>
    %30 = tpu.matmul %27, %29, %cst_7 {dimension_numbers = #tpu.dot_dimension_numbers<[1], [0], [0], [1], [0, 0, 1, 1], [], []>} : vector<1x8xf32>, vector<8x32xf32>, vector<1x32xf32> -> vector<1x32xf32>
    %cst_8 = arith.constant 1.250000e-01 : f32
    %31 = vector.broadcast %cst_8 : f32 to vector<1x32xf32>
    %32 = arith.mulf %28, %31 : vector<1x32xf32>
    %cst_9 = arith.constant 1.250000e-01 : f32
    %33 = vector.broadcast %cst_9 : f32 to vector<1x32xf32>
    %34 = arith.mulf %30, %33 : vector<1x32xf32>
    %35 = arith.mulf %32, %32 : vector<1x32xf32>
    %36 = arith.subf %34, %35 : vector<1x32xf32>
    %cst_10 = arith.constant 0.000000e+00 : f32
    %37 = vector.broadcast %cst_10 : f32 to vector<1x32xf32>
    %38 = arith.maximumf %36, %37 : vector<1x32xf32>
    %cst_11 = arith.constant 9.99999974E-6 : f32
    %39 = vector.broadcast %cst_11 : f32 to vector<1x32xf32>
    %40 = arith.addf %38, %39 : vector<1x32xf32>
    %41 = math.rsqrt %40 : vector<1x32xf32>
    %42 = arith.mulf %25, %41 : vector<1x32xf32>
    %43 = arith.mulf %32, %42 : vector<1x32xf32>
    %44 = arith.subf %26, %43 : vector<1x32xf32>
    %45 = vector.broadcast %42 : vector<1x32xf32> to vector<8x32xf32>
    %46 = arith.mulf %24, %45 : vector<8x32xf32>
    %47 = vector.broadcast %44 : vector<1x32xf32> to vector<8x32xf32>
    %48 = arith.addf %46, %47 : vector<8x32xf32>
    %cst_12 = arith.constant 0.000000e+00 : f32
    %49 = vector.broadcast %cst_12 : f32 to vector<8x32xf32>
    %50 = arith.maximumf %48, %49 : vector<8x32xf32>
    %c0_13 = arith.constant 0 : index
    %c0_14 = arith.constant 0 : index
    %51 = vector.load %arg3[%c0_13, %c0_14] : memref<32x128xf32, #tpu.memory_space<vmem>>, vector<32x128xf32>
    %cst_15 = arith.constant dense<0.000000e+00> : vector<8x128xf32>
    %52 = tpu.matmul %50, %51, %cst_15 {dimension_numbers = #tpu.dot_dimension_numbers<[1], [0], [0], [1], [0, 0, 1, 1], [], []>} : vector<8x32xf32>, vector<32x128xf32>, vector<8x128xf32> -> vector<8x128xf32>
    %c0_16 = arith.constant 0 : index
    %c0_17 = arith.constant 0 : index
    %53 = vector.load %arg4[%c0_16, %c0_17] : memref<2x128xf32, #tpu.memory_space<vmem>>, vector<1x128xf32>
    %c1_18 = arith.constant 1 : index
    %c0_19 = arith.constant 0 : index
    %54 = vector.load %arg4[%c1_18, %c0_19] : memref<2x128xf32, #tpu.memory_space<vmem>>, vector<1x128xf32>
    %cst_20 = arith.constant 1.000000e+00 : f32
    %55 = vector.broadcast %cst_20 : f32 to vector<1x8xf32>
    %cst_21 = arith.constant dense<0.000000e+00> : vector<1x128xf32>
    %56 = tpu.matmul %55, %52, %cst_21 {dimension_numbers = #tpu.dot_dimension_numbers<[1], [0], [0], [1], [0, 0, 1, 1], [], []>} : vector<1x8xf32>, vector<8x128xf32>, vector<1x128xf32> -> vector<1x128xf32>
    %57 = arith.mulf %52, %52 : vector<8x128xf32>
    %cst_22 = arith.constant dense<0.000000e+00> : vector<1x128xf32>
    %58 = tpu.matmul %55, %57, %cst_22 {dimension_numbers = #tpu.dot_dimension_numbers<[1], [0], [0], [1], [0, 0, 1, 1], [], []>} : vector<1x8xf32>, vector<8x128xf32>, vector<1x128xf32> -> vector<1x128xf32>
    %cst_23 = arith.constant 1.250000e-01 : f32
    %59 = vector.broadcast %cst_23 : f32 to vector<1x128xf32>
    %60 = arith.mulf %56, %59 : vector<1x128xf32>
    %cst_24 = arith.constant 1.250000e-01 : f32
    %61 = vector.broadcast %cst_24 : f32 to vector<1x128xf32>
    %62 = arith.mulf %58, %61 : vector<1x128xf32>
    %63 = arith.mulf %60, %60 : vector<1x128xf32>
    %64 = arith.subf %62, %63 : vector<1x128xf32>
    %cst_25 = arith.constant 0.000000e+00 : f32
    %65 = vector.broadcast %cst_25 : f32 to vector<1x128xf32>
    %66 = arith.maximumf %64, %65 : vector<1x128xf32>
    %cst_26 = arith.constant 9.99999974E-6 : f32
    %67 = vector.broadcast %cst_26 : f32 to vector<1x128xf32>
    %68 = arith.addf %66, %67 : vector<1x128xf32>
    %69 = math.rsqrt %68 : vector<1x128xf32>
    %70 = arith.mulf %53, %69 : vector<1x128xf32>
    %71 = arith.mulf %60, %70 : vector<1x128xf32>
    %72 = arith.subf %54, %71 : vector<1x128xf32>
    %73 = vector.broadcast %70 : vector<1x128xf32> to vector<8x128xf32>
    %74 = arith.mulf %52, %73 : vector<8x128xf32>
    %75 = vector.broadcast %72 : vector<1x128xf32> to vector<8x128xf32>
    %76 = arith.addf %74, %75 : vector<8x128xf32>
    %cst_27 = arith.constant 0.000000e+00 : f32
    %77 = vector.broadcast %cst_27 : f32 to vector<8x128xf32>
    %78 = arith.maximumf %76, %77 : vector<8x128xf32>
    %c0_28 = arith.constant 0 : index
    %c0_29 = arith.constant 0 : index
    %79 = vector.load %arg5[%c0_28, %c0_29] : memref<8x128xf32, #tpu.memory_space<vmem>>, vector<8x128xf32>
    tpu.vector_store %arg5[%c0_28, %c0_29], %78 {strides = array<i32>} : memref<8x128xf32, #tpu.memory_space<vmem>>, vector<8x128xf32>,
    return
  }
}

</mosaic_0001>

<llo_original>
// kernel: tpu_custom_call.1
$region0: #{tpu_custom_call.1}
  #allocation0 [shape = 'u32[]', space=smem, size = 0x4, offset = 0x4, fixed_abs, tag = 'smem constant byte address 0x4 - core index']
  #allocation1 [shape = 'u32[144,128]{1,0:T(1,128)}', space=vmem, size = 0x12000, scoped, tag = 'internal scratch']
  %s0 = inlined_call_operand.vmem [shape: f32[8,4], index: 0, kind: input, shape index: {}]
  %s1 = inlined_call_operand.vmem [shape: f32[4,32], index: 1, kind: input, shape index: {}]
  %s2 = inlined_call_operand.vmem [shape: f32[2,32], index: 2, kind: input, shape index: {}]
  %s3 = inlined_call_operand.hbm [shape: f32[32,128], index: 3, kind: input, shape index: {}]
  %s4 = inlined_call_operand.vmem [shape: f32[2,128], index: 4, kind: input, shape index: {}]
  %s5 = inlined_call_operand.hbm [shape: f32[8,128], index: 5, kind: output, shape index: {}]
  %s6 = sld [smem:[#allocation0]]
  $region34: #{tpu_custom_call.1} parent=0
    _
  %s8 = ssub.s32 1, %s6
  %s9 = scalar_select 0, %s8, %s6
  $region1: #{tpu_custom_call.1} parent=0
    #allocation2 [shape = 'u8[16384]{0}', space=vmem, size = 0x4000, scoped, tag = 'input window, operand 3, single buffered']
    #allocation3 [shape = 's32[1]{0}', space=sflag, size = 0x4, scoped, tag = 'scoped memory for tpu_custom_call.1']
    #allocation4 [shape = 's32[1]{0}', space=sflag, size = 0x4, scoped, tag = 'scoped memory for tpu_custom_call.1']
    #allocation5 [shape = 'u8[4096]{0}', space=vmem, size = 0x1000, scoped, tag = 'output window, operand 0, single buffered']
    %10 = vsyncpa [#allocation3], 0
    %11 = vsyncpa [#allocation4], 0
    // Predicated region
    $region2: #{tpu_custom_call.1} parent=1 // pred_check
      _
    $region3: #{tpu_custom_call.1} parent=1 // pred_check_branch
      %13 = sbr.rel (0) target = $region5
    $region4: #{tpu_custom_call.1} parent=1 // pred_region
      _
    $region5: #{tpu_custom_call.1} parent=1 // pred_fallthru
      _
    // Predicated region
    $region6: #{tpu_custom_call.1} parent=1 // pred_check
      _
    $region7: #{tpu_custom_call.1} parent=1 // pred_check_branch
      %15 = sbr.rel (0) target = $region9
    $region8: #{tpu_custom_call.1} parent=1 // pred_region
      _
    $region9: #{tpu_custom_call.1} parent=1 // pred_fallthru
      _
    // Predicated region
    $region10: #{tpu_custom_call.1} parent=1 // pred_check
      _
    $region11: #{tpu_custom_call.1} parent=1 // pred_check_branch
      %17 = sbr.rel (0) target = $region13
    $region12: #{tpu_custom_call.1} parent=1 // pred_region
      _
    $region13: #{tpu_custom_call.1} parent=1 // pred_fallthru
      _
    // Predicated region
    $region14: #{tpu_custom_call.1} parent=1 // pred_check
      _
    $region15: #{tpu_custom_call.1} parent=1 // pred_check_branch
      %19 = sbr.rel (0) target = $region17
    $region16: #{tpu_custom_call.1} parent=1 // pred_region
      %s21 = ssub.s32 512, 512
      %22 = vsyncadd [#allocation3], %s21
      %s23 = sshll.u32 [#allocation2], 4
      %s24 = int_to_ptr.vmem [resolvable:$true] %s23
      %29 = dma.hbm_to_vmem [thread:$0]  %s3, 512, %s24, [#allocation3], 128, 128, 8
    $region17: #{tpu_custom_call.1} parent=1 // pred_fallthru
      _
    // Predicated region
    $region18: #{tpu_custom_call.1} parent=1 // pred_check
      _
    $region19: #{tpu_custom_call.1} parent=1 // pred_check_branch
      %31 = sbr.rel (0) target = $region21
    $region20: #{tpu_custom_call.1} parent=1 // pred_region
      _
    $region21: #{tpu_custom_call.1} parent=1 // pred_fallthru
      _
    // Predicated region
    $region22: #{tpu_custom_call.1} parent=1 // pred_check
      _
    $region23: #{tpu_custom_call.1} parent=1 // pred_check_branch
      %33 = sbr.rel (0) target = $region25
    $region24: #{tpu_custom_call.1} parent=1 // pred_region
      %34 = dma.done [#allocation3], 512
    $region25: #{tpu_custom_call.1} parent=1 // pred_fallthru
      _
    %v35 = vld [vmem:[%s0] sm:$0xff]
    %v36 = vld [vmem:[%s1] sm:$0xf]
    %38 = vset.pattern.permute.xlu0 0
    %39 = vperm.xlu0 %38, %v35
    %v40 = vpop.permute.xlu0 %39
    %v42 = vlaneseq
    %v43 = vshrl.u32 %v42, 7
    %v44 = vsub.s32 0, %v43
    %v45 = vrot.slane %v36, %v44
    %v46 = vmul.f32 %v40, %v45
    %47 = vset.pattern.permute.xlu0 1
    %48 = vperm.xlu0 %47, %v35
    %v49 = vpop.permute.xlu0 %48
    %v51 = vlaneseq
    %v52 = vshrl.u32 %v51, 7
    %v53 = vsub.s32 1, %v52
    %v54 = vrot.slane %v36, %v53
    %v55 = vmul.f32 %v49, %v54
    %v56 = vadd.f32 %v46, %v55
    %57 = vset.pattern.permute.xlu0 2
    %58 = vperm.xlu0 %57, %v35
    %v59 = vpop.permute.xlu0 %58
    %v61 = vlaneseq
    %v62 = vshrl.u32 %v61, 7
    %v63 = vsub.s32 2, %v62
    %v64 = vrot.slane %v36, %v63
    %v65 = vmul.f32 %v59, %v64
    %v66 = vadd.f32 %v56, %v65
    %67 = vset.pattern.permute.xlu0 3
    %68 = vperm.xlu0 %67, %v35
    %v69 = vpop.permute.xlu0 %68
    %v71 = vlaneseq
    %v72 = vshrl.u32 %v71, 7
    %v73 = vsub.s32 3, %v72
    %v74 = vrot.slane %v36, %v73
    %v75 = vmul.f32 %v69, %v74
    %v76 = vadd.f32 %v66, %v75
    %v77 = vld [vmem:[%s2] sm:$0x1]
    %v78 = vld [vmem:[%s2 + $0x1] sm:$0x1]
    %vm79 = vcmask 64512
    %v81 = vsel %vm79, 1.0, 0
    %83 = vmatprep.subr.mxu0 0.0
    %84 = vmatpush1.msra.mxu0 %v76
    %85 = vmatprep.subr.mxu0 0.0
    %86 = vmatpush1.msra.mxu0 0.0
    %87 = vmatprep.subr.mxu0 0.0
    %88 = vmatpush1.msra.mxu0 0.0
    %89 = vmatprep.subr.mxu0 0.0
    %90 = vmatpush1.msra.mxu0 0.0
    %91 = vmatprep.subr.mxu0 0.0
    %92 = vmatpush1.msra.mxu0 0.0
    %93 = vmatprep.subr.mxu0 0.0
    %94 = vmatpush1.msra.mxu0 0.0
    %95 = vmatprep.subr.mxu0 0.0
    %96 = vmatpush1.msra.mxu0 0.0
    %97 = vmatprep.subr.mxu0 0.0
    %98 = vmatpush1.msra.mxu0 0.0
    %99 = vmatprep.subr.mxu0 0.0
    %100 = vmatpush1.msra.mxu0 0.0
    %101 = vmatprep.subr.mxu0 0.0
    %102 = vmatpush1.msra.mxu0 0.0
    %103 = vmatprep.subr.mxu0 0.0
    %104 = vmatpush1.msra.mxu0 0.0
    %105 = vmatprep.subr.mxu0 0.0
    %106 = vmatpush1.msra.mxu0 0.0
    %107 = vmatprep.subr.mxu0 0.0
    %108 = vmatpush1.msra.mxu0 0.0
    %109 = vmatprep.subr.mxu0 0.0
    %110 = vmatpush1.msra.mxu0 0.0
    %111 = vmatprep.subr.mxu0 0.0
    %112 = vmatpush1.msra.mxu0 0.0
    %113 = vmatprep.subr.mxu0 0.0
    %114 = vmatpush1.msra.mxu0 0.0
    %115 = vmatprep.subr.mxu0 0.0
    %116 = vmatpush1.msra.mxu0 0.0
    %117 = vmatprep.subr.mxu0 0.0
    %118 = vmatpush1.msra.mxu0 0.0
    %119 = vmatprep.subr.mxu0 0.0
    %120 = vmatpush1.msra.mxu0 0.0
    %121 = vmatprep.subr.mxu0 0.0
    %122 = vmatpush1.msra.mxu0 0.0
    %123 = vmatprep.subr.mxu0 0.0
    %124 = vmatpush1.msra.mxu0 0.0
    %125 = vmatprep.subr.mxu0 0.0
    %126 = vmatpush1.msra.mxu0 0.0
    %127 = vmatprep.subr.mxu0 0.0
    %128 = vmatpush1.msra.mxu0 0.0
    %129 = vmatprep.subr.mxu0 0.0
    %130 = vmatpush1.msra.mxu0 0.0
    %131 = vmatprep.subr.mxu0 0.0
    %132 = vmatpush1.msra.mxu0 0.0
    %133 = vmatprep.subr.mxu0 0.0
    %134 = vmatpush1.msra.mxu0 0.0
    %135 = vmatprep.subr.mxu0 0.0
    %136 = vmatpush1.msra.mxu0 0.0
    %137 = vmatprep.subr.mxu0 0.0
    %138 = vmatpush1.msra.mxu0 0.0
    %139 = vmatprep.subr.mxu0 0.0
    %140 = vmatpush1.msra.mxu0 0.0
    %141 = vmatprep.subr.mxu0 0.0
    %142 = vmatpush1.msra.mxu0 0.0
    %143 = vmatprep.subr.mxu0 0.0
    %144 = vmatpush1.msra.mxu0 0.0
    %145 = vmatprep.subr.mxu0 0.0
    %146 = vmatpush1.msra.mxu0 0.0
    %147 = vmatprep.mubr.f32.mxu0 0.0
    %148 = vmatmul.mubr.f32.gmra.mrb[0].mxu0 %v81
    %v149 = vpop.f32.mrb[0].mxu0
    %v150 = vadd.f32 0.0, %v149
    %v151 = vpop.f32.mrb[0].mxu0
    %152 = vdwg.mxu0
    %v153 = vmul.f32 %v76, %v76
    %154 = vmatprep.subr.mxu0 0.0
    %155 = vmatpush1.msra.mxu0 %v153
    %156 = vmatprep.subr.mxu0 0.0
    %157 = vmatpush1.msra.mxu0 0.0
    %158 = vmatprep.subr.mxu0 0.0
    %159 = vmatpush1.msra.mxu0 0.0
    %160 = vmatprep.subr.mxu0 0.0
    %161 = vmatpush1.msra.mxu0 0.0
    %162 = vmatprep.subr.mxu0 0.0
    %163 = vmatpush1.msra.mxu0 0.0
    %164 = vmatprep.subr.mxu0 0.0
    %165 = vmatpush1.msra.mxu0 0.0
    %166 = vmatprep.subr.mxu0 0.0
    %167 = vmatpush1.msra.mxu0 0.0
    %168 = vmatprep.subr.mxu0 0.0
    %169 = vmatpush1.msra.mxu0 0.0
    %170 = vmatprep.subr.mxu0 0.0
    %171 = vmatpush1.msra.mxu0 0.0
    %172 = vmatprep.subr.mxu0 0.0
    %173 = vmatpush1.msra.mxu0 0.0
    %174 = vmatprep.subr.mxu0 0.0
    %175 = vmatpush1.msra.mxu0 0.0
    %176 = vmatprep.subr.mxu0 0.0
    %177 = vmatpush1.msra.mxu0 0.0
    %178 = vmatprep.subr.mxu0 0.0
    %179 = vmatpush1.msra.mxu0 0.0
    %180 = vmatprep.subr.mxu0 0.0
    %181 = vmatpush1.msra.mxu0 0.0
    %182 = vmatprep.subr.mxu0 0.0
    %183 = vmatpush1.msra.mxu0 0.0
    %184 = vmatprep.subr.mxu0 0.0
    %185 = vmatpush1.msra.mxu0 0.0
    %186 = vmatprep.subr.mxu0 0.0
    %187 = vmatpush1.msra.mxu0 0.0
    %188 = vmatprep.subr.mxu0 0.0
    %189 = vmatpush1.msra.mxu0 0.0
    %190 = vmatprep.subr.mxu0 0.0
    %191 = vmatpush1.msra.mxu0 0.0
    %192 = vmatprep.subr.mxu0 0.0
    %193 = vmatpush1.msra.mxu0 0.0
    %194 = vmatprep.subr.mxu0 0.0
    %195 = vmatpush1.msra.mxu0 0.0
    %196 = vmatprep.subr.mxu0 0.0
    %197 = vmatpush1.msra.mxu0 0.0
    %198 = vmatprep.subr.mxu0 0.0
    %199 = vmatpush1.msra.mxu0 0.0
    %200 = vmatprep.subr.mxu0 0.0
    %201 = vmatpush1.msra.mxu0 0.0
    %202 = vmatprep.subr.mxu0 0.0
    %203 = vmatpush1.msra.mxu0 0.0
    %204 = vmatprep.subr.mxu0 0.0
    %205 = vmatpush1.msra.mxu0 0.0
    %206 = vmatprep.subr.mxu0 0.0
    %207 = vmatpush1.msra.mxu0 0.0
    %208 = vmatprep.subr.mxu0 0.0
    %209 = vmatpush1.msra.mxu0 0.0
    %210 = vmatprep.subr.mxu0 0.0
    %211 = vmatpush1.msra.mxu0 0.0
    %212 = vmatprep.subr.mxu0 0.0
    %213 = vmatpush1.msra.mxu0 0.0
    %214 = vmatprep.subr.mxu0 0.0
    %215 = vmatpush1.msra.mxu0 0.0
    %216 = vmatprep.subr.mxu0 0.0
    %217 = vmatpush1.msra.mxu0 0.0
    %218 = vmatprep.mubr.f32.mxu0 0.0
    %219 = vmatmul.mubr.f32.gmra.mrb[0].mxu0 %v81
    %v220 = vpop.f32.mrb[0].mxu0
    %v221 = vadd.f32 0.0, %v220
    %v222 = vpop.f32.mrb[0].mxu0
    %223 = vdwg.mxu0
    %v224 = vmul.f32 %v150, 0.125
    %v225 = vmul.f32 %v221, 0.125
    %v226 = vmul.f32 %v224, %v224
    %v227 = vsub.f32 %v225, %v226
    %v228 = vmax.f32 %v227, 0.0
    %v229 = vadd.f32 %v228, 1e-05
    %v230 = vrsqrt.pop %v229
    %v231 = vmul.f32 %v77, %v230
    %v232 = vmul.f32 %v224, %v231
    %v233 = vsub.f32 %v78, %v232
    %v234 = vlaneseq
    %v235 = vshrl.u32 %v234, 7
    %v236 = vsub.s32 0, %v235
    %v237 = vrot.slane %v231, %v236
    %v238 = vmul.f32 %v76, %v237
    %v239 = vlaneseq
    %v240 = vshrl.u32 %v239, 7
    %v241 = vsub.s32 0, %v240
    %v242 = vrot.slane %v233, %v241
    %v243 = vadd.f32 %v238, %v242
    %v244 = vmax.f32 %v243, 0.0
    %v245 = vld [vmem:[#allocation2] sm:$0xff]
    %v246 = vld [vmem:[#allocation2 + $0x8] sm:$0xff]
    %v247 = vld [vmem:[#allocation2 + $0x10] sm:$0xff]
    %v248 = vld [vmem:[#allocation2 + $0x18] sm:$0xff]
    %vm249 = vcmask 261120
    %v251 = vsel %vm249, %v244, 0
    %253 = vmatprep.subr.mxu0 0.0
    %254 = vmatpush1.msra.mxu0 %v245
    %255 = vmatprep.subr.mxu0 0.0
    %256 = vmatpush1.msra.mxu0 %v246
    %257 = vmatprep.subr.mxu0 0.0
    %258 = vmatpush1.msra.mxu0 %v247
    %259 = vmatprep.subr.mxu0 0.0
    %260 = vmatpush1.msra.mxu0 %v248
    %261 = vmatprep.subr.mxu0 0.0
    %262 = vmatpush1.msra.mxu0 0.0
    %263 = vmatprep.subr.mxu0 0.0
    %264 = vmatpush1.msra.mxu0 0.0
    %265 = vmatprep.subr.mxu0 0.0
    %266 = vmatpush1.msra.mxu0 0.0
    %267 = vmatprep.subr.mxu0 0.0
    %268 = vmatpush1.msra.mxu0 0.0
    %269 = vmatprep.subr.mxu0 0.0
    %270 = vmatpush1.msra.mxu0 0.0
    %271 = vmatprep.subr.mxu0 0.0
    %272 = vmatpush1.msra.mxu0 0.0
    %273 = vmatprep.subr.mxu0 0.0
    %274 = vmatpush1.msra.mxu0 0.0
    %275 = vmatprep.subr.mxu0 0.0
    %276 = vmatpush1.msra.mxu0 0.0
    %277 = vmatprep.subr.mxu0 0.0
    %278 = vmatpush1.msra.mxu0 0.0
    %279 = vmatprep.subr.mxu0 0.0
    %280 = vmatpush1.msra.mxu0 0.0
    %281 = vmatprep.subr.mxu0 0.0
    %282 = vmatpush1.msra.mxu0 0.0
    %283 = vmatprep.subr.mxu0 0.0
    %284 = vmatpush1.msra.mxu0 0.0
    %285 = vmatprep.subr.mxu0 0.0
    %286 = vmatpush1.msra.mxu0 0.0
    %287 = vmatprep.subr.mxu0 0.0
    %288 = vmatpush1.msra.mxu0 0.0
    %289 = vmatprep.subr.mxu0 0.0
    %290 = vmatpush1.msra.mxu0 0.0
    %291 = vmatprep.subr.mxu0 0.0
    %292 = vmatpush1.msra.mxu0 0.0
    %293 = vmatprep.subr.mxu0 0.0
    %294 = vmatpush1.msra.mxu0 0.0
    %295 = vmatprep.subr.mxu0 0.0
    %296 = vmatpush1.msra.mxu0 0.0
    %297 = vmatprep.subr.mxu0 0.0
    %298 = vmatpush1.msra.mxu0 0.0
    %299 = vmatprep.subr.mxu0 0.0
    %300 = vmatpush1.msra.mxu0 0.0
    %301 = vmatprep.subr.mxu0 0.0
    %302 = vmatpush1.msra.mxu0 0.0
    %303 = vmatprep.subr.mxu0 0.0
    %304 = vmatpush1.msra.mxu0 0.0
    %305 = vmatprep.subr.mxu0 0.0
    %306 = vmatpush1.msra.mxu0 0.0
    %307 = vmatprep.subr.mxu0 0.0
    %308 = vmatpush1.msra.mxu0 0.0
    %309 = vmatprep.subr.mxu0 0.0
    %310 = vmatpush1.msra.mxu0 0.0
    %311 = vmatprep.subr.mxu0 0.0
    %312 = vmatpush1.msra.mxu0 0.0
    %313 = vmatprep.subr.mxu0 0.0
    %314 = vmatpush1.msra.mxu0 0.0
    %315 = vmatprep.subr.mxu0 0.0
    %316 = vmatpush1.msra.mxu0 0.0
    %317 = vmatprep.mubr.f32.mxu0 0.0
    %318 = vmatmul.mubr.f32.gmra.mrb[0].mxu0 %v251
    %v319 = vpop.f32.mrb[0].mxu0
    %v320 = vadd.f32 0.0, %v319
    %v321 = vpop.f32.mrb[0].mxu0
    %322 = vdwg.mxu0
    %v323 = vld [vmem:[%s4] sm:$0x1]
    %v324 = vld [vmem:[%s4 + $0x1] sm:$0x1]
    %325 = vmatprep.subr.mxu0 0.0
    %326 = vmatpush1.msra.mxu0 %v320
    %327 = vmatprep.subr.mxu0 0.0
    %328 = vmatpush1.msra.mxu0 0.0
    %329 = vmatprep.subr.mxu0 0.0
    %330 = vmatpush1.msra.mxu0 0.0
    %331 = vmatprep.subr.mxu0 0.0
    %332 = vmatpush1.msra.mxu0 0.0
    %333 = vmatprep.subr.mxu0 0.0
    %334 = vmatpush1.msra.mxu0 0.0
    %335 = vmatprep.subr.mxu0 0.0
    %336 = vmatpush1.msra.mxu0 0.0
    %337 = vmatprep.subr.mxu0 0.0
    %338 = vmatpush1.msra.mxu0 0.0
    %339 = vmatprep.subr.mxu0 0.0
    %340 = vmatpush1.msra.mxu0 0.0
    %341 = vmatprep.subr.mxu0 0.0
    %342 = vmatpush1.msra.mxu0 0.0
    %343 = vmatprep.subr.mxu0 0.0
    %344 = vmatpush1.msra.mxu0 0.0
    %345 = vmatprep.subr.mxu0 0.0
    %346 = vmatpush1.msra.mxu0 0.0
    %347 = vmatprep.subr.mxu0 0.0
    %348 = vmatpush1.msra.mxu0 0.0
    %349 = vmatprep.subr.mxu0 0.0
    %350 = vmatpush1.msra.mxu0 0.0
    %351 = vmatprep.subr.mxu0 0.0
    %352 = vmatpush1.msra.mxu0 0.0
    %353 = vmatprep.subr.mxu0 0.0
    %354 = vmatpush1.msra.mxu0 0.0
    %355 = vmatprep.subr.mxu0 0.0
    %356 = vmatpush1.msra.mxu0 0.0
    %357 = vmatprep.subr.mxu0 0.0
    %358 = vmatpush1.msra.mxu0 0.0
    %359 = vmatprep.subr.mxu0 0.0
    %360 = vmatpush1.msra.mxu0 0.0
    %361 = vmatprep.subr.mxu0 0.0
    %362 = vmatpush1.msra.mxu0 0.0
    %363 = vmatprep.subr.mxu0 0.0
    %364 = vmatpush1.msra.mxu0 0.0
    %365 = vmatprep.subr.mxu0 0.0
    %366 = vmatpush1.msra.mxu0 0.0
    %367 = vmatprep.subr.mxu0 0.0
    %368 = vmatpush1.msra.mxu0 0.0
    %369 = vmatprep.subr.mxu0 0.0
    %370 = vmatpush1.msra.mxu0 0.0
    %371 = vmatprep.subr.mxu0 0.0
    %372 = vmatpush1.msra.mxu0 0.0
    %373 = vmatprep.subr.mxu0 0.0
    %374 = vmatpush1.msra.mxu0 0.0
    %375 = vmatprep.subr.mxu0 0.0
    %376 = vmatpush1.msra.mxu0 0.0
    %377 = vmatprep.subr.mxu0 0.0
    %378 = vmatpush1.msra.mxu0 0.0
    %379 = vmatprep.subr.mxu0 0.0
    %380 = vmatpush1.msra.mxu0 0.0
    %381 = vmatprep.subr.mxu0 0.0
    %382 = vmatpush1.msra.mxu0 0.0
    %383 = vmatprep.subr.mxu0 0.0
    %384 = vmatpush1.msra.mxu0 0.0
    %385 = vmatprep.subr.mxu0 0.0
    %386 = vmatpush1.msra.mxu0 0.0
    %387 = vmatprep.subr.mxu0 0.0
    %388 = vmatpush1.msra.mxu0 0.0
    %389 = vmatprep.mubr.f32.mxu0 0.0
    %390 = vmatmul.mubr.f32.gmra.mrb[0].mxu0 %v81
    %v391 = vpop.f32.mrb[0].mxu0
    %v392 = vadd.f32 0.0, %v391
    %v393 = vpop.f32.mrb[0].mxu0
    %394 = vdwg.mxu0
    %v395 = vmul.f32 %v320, %v320
    %396 = vmatprep.subr.mxu0 0.0
    %397 = vmatpush1.msra.mxu0 %v395
    %398 = vmatprep.subr.mxu0 0.0
    %399 = vmatpush1.msra.mxu0 0.0
    %400 = vmatprep.subr.mxu0 0.0
    %401 = vmatpush1.msra.mxu0 0.0
    %402 = vmatprep.subr.mxu0 0.0
    %403 = vmatpush1.msra.mxu0 0.0
    %404 = vmatprep.subr.mxu0 0.0
    %405 = vmatpush1.msra.mxu0 0.0
    %406 = vmatprep.subr.mxu0 0.0
    %407 = vmatpush1.msra.mxu0 0.0
    %408 = vmatprep.subr.mxu0 0.0
    %409 = vmatpush1.msra.mxu0 0.0
    %410 = vmatprep.subr.mxu0 0.0
    %411 = vmatpush1.msra.mxu0 0.0
    %412 = vmatprep.subr.mxu0 0.0
    %413 = vmatpush1.msra.mxu0 0.0
    %414 = vmatprep.subr.mxu0 0.0
    %415 = vmatpush1.msra.mxu0 0.0
    %416 = vmatprep.subr.mxu0 0.0
    %417 = vmatpush1.msra.mxu0 0.0
    %418 = vmatprep.subr.mxu0 0.0
    %419 = vmatpush1.msra.mxu0 0.0
    %420 = vmatprep.subr.mxu0 0.0
    %421 = vmatpush1.msra.mxu0 0.0
    %422 = vmatprep.subr.mxu0 0.0
    %423 = vmatpush1.msra.mxu0 0.0
    %424 = vmatprep.subr.mxu0 0.0
    %425 = vmatpush1.msra.mxu0 0.0
    %426 = vmatprep.subr.mxu0 0.0
    %427 = vmatpush1.msra.mxu0 0.0
    %428 = vmatprep.subr.mxu0 0.0
    %429 = vmatpush1.msra.mxu0 0.0
    %430 = vmatprep.subr.mxu0 0.0
    %431 = vmatpush1.msra.mxu0 0.0
    %432 = vmatprep.subr.mxu0 0.0
    %433 = vmatpush1.msra.mxu0 0.0
    %434 = vmatprep.subr.mxu0 0.0
    %435 = vmatpush1.msra.mxu0 0.0
    %436 = vmatprep.subr.mxu0 0.0
    %437 = vmatpush1.msra.mxu0 0.0
    %438 = vmatprep.subr.mxu0 0.0
    %439 = vmatpush1.msra.mxu0 0.0
    %440 = vmatprep.subr.mxu0 0.0
    %441 = vmatpush1.msra.mxu0 0.0
    %442 = vmatprep.subr.mxu0 0.0
    %443 = vmatpush1.msra.mxu0 0.0
    %444 = vmatprep.subr.mxu0 0.0
    %445 = vmatpush1.msra.mxu0 0.0
    %446 = vmatprep.subr.mxu0 0.0
    %447 = vmatpush1.msra.mxu0 0.0
    %448 = vmatprep.subr.mxu0 0.0
    %449 = vmatpush1.msra.mxu0 0.0
    %450 = vmatprep.subr.mxu0 0.0
    %451 = vmatpush1.msra.mxu0 0.0
    %452 = vmatprep.subr.mxu0 0.0
    %453 = vmatpush1.msra.mxu0 0.0
    %454 = vmatprep.subr.mxu0 0.0
    %455 = vmatpush1.msra.mxu0 0.0
    %456 = vmatprep.subr.mxu0 0.0
    %457 = vmatpush1.msra.mxu0 0.0
    %458 = vmatprep.subr.mxu0 0.0
    %459 = vmatpush1.msra.mxu0 0.0
    %460 = vmatprep.mubr.f32.mxu0 0.0
    %461 = vmatmul.mubr.f32.gmra.mrb[0].mxu0 %v81
    %v462 = vpop.f32.mrb[0].mxu0
    %v463 = vadd.f32 0.0, %v462
    %v464 = vpop.f32.mrb[0].mxu0
    %465 = vdwg.mxu0
    %v466 = vmul.f32 %v392, 0.125
    %v467 = vmul.f32 %v463, 0.125
    %v468 = vmul.f32 %v466, %v466
    %v469 = vsub.f32 %v467, %v468
    %v470 = vmax.f32 %v469, 0.0
    %v471 = vadd.f32 %v470, 1e-05
    %v472 = vrsqrt.pop %v471
    %v473 = vmul.f32 %v323, %v472
    %v474 = vmul.f32 %v466, %v473
    %v475 = vsub.f32 %v324, %v474
    %v476 = vlaneseq
    %v477 = vshrl.u32 %v476, 7
    %v478 = vsub.s32 0, %v477
    %v479 = vrot.slane %v473, %v478
    %v480 = vmul.f32 %v320, %v479
    %v481 = vlaneseq
    %v482 = vshrl.u32 %v481, 7
    %v483 = vsub.s32 0, %v482
    %v484 = vrot.slane %v475, %v483
    %v485 = vadd.f32 %v480, %v484
    %v486 = vmax.f32 %v485, 0.0
    %487 = vst [vmem:[#allocation5] sm:$0xff] %v486
    // Predicated region
    $region26: #{tpu_custom_call.1} parent=1 // pred_check
      _
    $region27: #{tpu_custom_call.1} parent=1 // pred_check_branch
      %489 = sbr.rel (0) target = $region29
    $region28: #{tpu_custom_call.1} parent=1 // pred_region
      %s491 = ssub.s32 128, 128
      %492 = vsyncadd [#allocation4], %s491
      %s494 = sshll.u32 [#allocation5], 4
      %s495 = int_to_ptr.vmem [resolvable:$true] %s494
      %497 = dma.vmem_to_hbm [thread:$0]  %s495, 128, %s5, [#allocation4]
    $region29: #{tpu_custom_call.1} parent=1 // pred_fallthru
      _
    // Predicated region
    $region30: #{tpu_custom_call.1} parent=1 // pred_check
      _
    $region31: #{tpu_custom_call.1} parent=1 // pred_check_branch
      %499 = sbr.rel (0) target = $region33
    $region32: #{tpu_custom_call.1} parent=1 // pred_region
      %500 = dma.done [#allocation4], 128
    $region33: #{tpu_custom_call.1} parent=1 // pred_fallthru
      _
    %501 = vsyncpa [#allocation3], 1
    %502 = vsyncpa [#allocation4], 1

</llo_original>
